<compile_context>
chip_gen: v6e
topology: v6e:2x2x1
jax: 0.10.0
libtpu: 0.0.40
codegen_flags: <defaults>
</compile_context>

<pallas_src>
import functools

import jax
import jax.numpy as jnp
from jax.experimental import pallas as pl
from jax.experimental.pallas import tpu as pltpu


def _round_up(v, m):
    return ((v + m - 1) // m) * m


def _vmem_capacity_bytes():
    # Conservative (v7x-sized) fallback if the query is unavailable.
    try:
        return int(pltpu.get_tpu_info().vmem_capacity_bytes)
    except Exception:
        return 64 * 1024 * 1024


def _simi_row_kernel(fq_ref, sqq_ref, fk_ref, sqk_ref, o_ref):
    # fq_ref:  (1, TQ, C)   query rows, pre-scaled by 2/wei
    # sqq_ref: (1, TQ, 1)   ||f_i||^2 / wei
    # fk_ref:  (1, C, HWp)  all key features, channel-major (HW on lanes)
    # sqk_ref: (1, 1, HWp)  ||f_j||^2 / wei  (1e30 in padded lanes -> exp = 0)
    # o_ref:   (1, TQ, HWp) row-normalized similarity rows
    fq = fq_ref[0]                                              # (TQ, C)
    sq_q = sqq_ref[0]                                           # (TQ, 1)
    fk = fk_ref[0]                                              # (C, HWp)
    sq_k = sqk_ref[0]                                           # (1, HWp)

    # Gram on the MXU: (TQ, C) @ (C, HWp) -> (TQ, HWp), f32 accumulation.
    gram = jnp.dot(fq, fk, preferred_element_type=jnp.float32)

    # logits = -||f_i - f_j||^2 / wei  (<= 0 up to fp rounding; ~-1e30 at pads)
    logits = gram - sq_k - sq_q                                 # (TQ, HWp)
    p = jnp.exp(logits)                                         # EUP
    row_sum = jnp.sum(p, axis=-1, keepdims=True)                # (TQ, 1)
    o_ref[0] = (p * pl.reciprocal(row_sum, approx=False)).astype(o_ref.dtype)


def dist2_simi_matrix_batch(x, wei=1.0, out_dtype=jnp.float32):
    """x: (N, C, H, W) -> (N, H*W, H*W) row-normalized Gaussian similarity.

    wei may be a Python float or a traced JAX scalar (learnable bandwidth);
    it is consumed only by cheap wrapper-side ops, so no recompile on change.
    out_dtype=jnp.bfloat16 halves the (dominant) HBM writeback if acceptable.
    """
    N, C, H, W = x.shape
    hw = H * W
    hwp = _round_up(hw, 128)                       # lane-dense output columns
    rows = hw if hw % 8 == 0 else _round_up(hw, 8)  # exact rows when aligned
    itemsize = jnp.dtype(out_dtype).itemsize

    wei = jnp.asarray(wei, jnp.float32)
    inv_wei = 1.0 / wei

    # Glue (all tiny vs. the N*HW^2 output):
    #   keys    (N, C, HW)  channel-major, pure reshape (no HBM transpose)
    #   queries (N, HW, C)  small transpose, pre-scaled by 2/wei
    #   sq_q    (N, HW, 1)  ||f_i||^2 / wei
    #   sq_k    (N, 1, HWp) ||f_j||^2 / wei, 1e30 in padded lanes (masks cols)
    feats_k = x.reshape(N, C, hw).astype(jnp.float32)
    feats_q = jnp.transpose(feats_k, (0, 2, 1))
    sq_q = jnp.sum(feats_q * feats_q, axis=-1, keepdims=True) * inv_wei
    sq_k = jnp.sum(feats_k * feats_k, axis=1, keepdims=True) * inv_wei
    fq_scaled = feats_q * (2.0 * inv_wei)

    if hwp != hw:
        feats_k = jnp.pad(feats_k, ((0, 0), (0, 0), (0, hwp - hw)))
        sq_k = jnp.pad(sq_k, ((0, 0), (0, 0), (0, hwp - hw)),
                       constant_values=1e30)
    if rows != hw:
        fq_scaled = jnp.pad(fq_scaled, ((0, 0), (0, rows - hw), (0, 0)))
        sq_q = jnp.pad(sq_q, ((0, 0), (0, rows - hw), (0, 0)))

    # ---- Tile-size / VMEM budgeting (generation aware) -----------------
    vmem_cap = _vmem_capacity_bytes()
    c_pad = _round_up(C, 8)
    # Per output-row-of-tile bytes per pipeline stage: double-buffered output
    # block + ~2 f32 (TQ, HWp) temporaries (gram, p) + small query-side blocks
    # (lane-padded to 128).
    per_row = hwp * (2 * itemsize + 2 * 4) + 2 * (max(C, 128) + 128) * 4
    # Fixed: double-buffered keys + sq_k.
    fixed = 2 * (c_pad * hwp * 4 + hwp * 4)
    # ~40% of VMEM for tile-dependent state (≈25 MiB on 64 MiB v7x), capped
    # at 48 MiB on the 128 MiB v5e/v6e parts.
    budget = min(int(0.40 * vmem_cap), 48 * 1024 * 1024)
    max_tq_budget = max(8, (budget - fixed) // per_row)

    divisors = [d for d in range(8, min(rows, 1024) + 1, 8) if rows % d == 0]
    feasible = [d for d in divisors if d <= max_tq_budget] or [8]
    tq = max(feasible)
    # Keep >= 4 total grid steps when possible (dual-TC sharding on v7x and a
    # warm DMA pipeline) while using the largest tile that allows it.
    for d in sorted(feasible, reverse=True):
        if N * (rows // d) >= 4:
            tq = d
            break

    vmem_est = fixed + tq * per_row + (1 << 20)    # +1 MiB internal scratch
    vmem_limit = int(min(vmem_cap * 7 // 8,
                         max(32 * 1024 * 1024, vmem_est + vmem_est // 2)))

    out = pl.pallas_call(
        _simi_row_kernel,
        out_shape=jax.ShapeDtypeStruct((N, rows, hwp), out_dtype),
        grid_spec=pltpu.PrefetchScalarGridSpec(
            num_scalar_prefetch=0,
            grid=(N, rows // tq),
            in_specs=[
                pl.BlockSpec((1, tq, C), lambda n, q: (n, q, 0)),    # queries
                pl.BlockSpec((1, tq, 1), lambda n, q: (n, q, 0)),    # sq_q
                pl.BlockSpec((1, C, hwp), lambda n, q: (n, 0, 0)),   # keys
                pl.BlockSpec((1, 1, hwp), lambda n, q: (n, 0, 0)),   # sq_k
            ],
            out_specs=pl.BlockSpec((1, tq, hwp), lambda n, q: (n, q, 0)),
        ),
        compiler_params=pltpu.CompilerParams(
            dimension_semantics=("parallel", "parallel"),
            vmem_limit_bytes=vmem_limit,
        ),
    )(fq_scaled, sq_q, feats_k, sq_k)

    # Only trim when padding was actually needed; for (8,128)-aligned HW the
    # kernel output is returned as-is (no extra HBM copy).  Padded columns are
    # exactly 0 (masked via sq_k); padded rows exist only when HW % 8 != 0.
    if rows != hw:
        out = out[:, :hw, :]
    if hwp != hw:
        out = out[:, :, :hw]
    return out


if __name__ == "__main__":
    key = jax.random.PRNGKey(0)
    N, C, H, W = 2, 4, 16, 16
    wei = 1.0                       # module init value; weights = log(wei)
    x = jax.random.normal(key, (N, C, H, W), dtype=jnp.float32)

    p = dist2_simi_matrix_batch(x, wei=wei)
    p = jax.block_until_ready(p)

    # Pure-JAX reference check.
    HW = H * W
    f = jnp.transpose(x.reshape(N, C, HW), (0, 2, 1))
    sq = jnp.sum(f * f, axis=-1, keepdims=True)
    d2 = jnp.maximum(sq + jnp.swapaxes(sq, 1, 2)
                     - 2.0 * jnp.einsum("npc,nqc->npq", f, f), 0.0)
    w = jnp.exp(-d2 / wei)
    ref = w / jnp.sum(w, axis=-1, keepdims=True)

    assert p.shape == (N, HW, HW)
    assert jnp.allclose(jnp.sum(p, axis=-1), 1.0, atol=1e-5)
    assert jnp.allclose(p, ref, atol=1e-5, rtol=1e-5)

    print("KERNEL_OK")
</pallas_src>

<mosaic_0001>
module attributes {stable_mosaic.version = 11 : i64} {
  func.func @_simi_row_kernel(%arg0: i32, %arg1: i32, %arg2: memref<1x128x4xf32, #tpu.memory_space<vmem>>, %arg3: memref<1x128x1xf32, #tpu.memory_space<vmem>>, %arg4: memref<1x4x256xf32, #tpu.memory_space<vmem>>, %arg5: memref<1x1x256xf32, #tpu.memory_space<vmem>>, %arg6: memref<1x128x256xf32, #tpu.memory_space<vmem>>) attributes {dimension_semantics = [#tpu.dimension_semantics<parallel>, #tpu.dimension_semantics<parallel>], iteration_bounds = array<i64: 2, 2>, scalar_prefetch = 0 : i64, scratch_operands = 0 : i64, tpu.core_type = #tpu.core_type<tc>, window_params = [{transform_indices = @transform_0, window_bounds = array<i64: 1, 128, 4>}, {transform_indices = @transform_1, window_bounds = array<i64: 1, 128, 1>}, {transform_indices = @transform_2, window_bounds = array<i64: 1, 4, 256>}, {transform_indices = @transform_3, window_bounds = array<i64: 1, 1, 256>}, {transform_indices = @transform_4, window_bounds = array<i64: 1, 128, 256>}]} {
    %c0 = arith.constant 0 : index
    %c0_0 = arith.constant 0 : index
    %c0_1 = arith.constant 0 : index
    %0 = vector.load %arg2[%c0, %c0_0, %c0_1] : memref<1x128x4xf32, #tpu.memory_space<vmem>>, vector<1x128x4xf32>
    %1 = vector.shape_cast %0 : vector<1x128x4xf32> to vector<128x4xf32>
    %c0_2 = arith.constant 0 : index
    %c0_3 = arith.constant 0 : index
    %c0_4 = arith.constant 0 : index
    %2 = vector.load %arg3[%c0_2, %c0_3, %c0_4] : memref<1x128x1xf32, #tpu.memory_space<vmem>>, vector<1x128x1xf32>
    %3 = vector.shape_cast %2 : vector<1x128x1xf32> to vector<128x1xf32>
    %c0_5 = arith.constant 0 : index
    %c0_6 = arith.constant 0 : index
    %c0_7 = arith.constant 0 : index
    %4 = vector.load %arg4[%c0_5, %c0_6, %c0_7] : memref<1x4x256xf32, #tpu.memory_space<vmem>>, vector<1x4x256xf32>
    %5 = vector.shape_cast %4 : vector<1x4x256xf32> to vector<4x256xf32>
    %c0_8 = arith.constant 0 : index
    %c0_9 = arith.constant 0 : index
    %c0_10 = arith.constant 0 : index
    %6 = vector.load %arg5[%c0_8, %c0_9, %c0_10] : memref<1x1x256xf32, #tpu.memory_space<vmem>>, vector<1x1x256xf32>
    %7 = vector.shape_cast %6 : vector<1x1x256xf32> to vector<1x256xf32>
    %cst = arith.constant dense<0.000000e+00> : vector<128x256xf32>
    %8 = tpu.matmul %1, %5, %cst {dimension_numbers = #tpu.dot_dimension_numbers<[1], [0], [0], [1], [0, 0, 1, 1], [], []>} : vector<128x4xf32>, vector<4x256xf32>, vector<128x256xf32> -> vector<128x256xf32>
    %9 = vector.broadcast %7 : vector<1x256xf32> to vector<128x256xf32>
    %10 = arith.subf %8, %9 : vector<128x256xf32>
    %11 = vector.broadcast %3 : vector<128x1xf32> to vector<128x256xf32>
    %12 = arith.subf %10, %11 : vector<128x256xf32>
    %13 = math.exp %12 : vector<128x256xf32>
    %cst_11 = arith.constant dense<0.000000e+00> : vector<128xf32>
    %14 = vector.multi_reduction <add>, %13, %cst_11 [1] : vector<128x256xf32> to vector<128xf32>
    %15 = vector.shape_cast %14 : vector<128xf32> to vector<128x1xf32>
    %16 = tpu.reciprocal %15 : vector<128x1xf32> -> vector<128x1xf32>
    %17 = vector.broadcast %16 : vector<128x1xf32> to vector<128x256xf32>
    %18 = arith.mulf %13, %17 : vector<128x256xf32>
    %c0_12 = arith.constant 0 : index
    %c0_13 = arith.constant 0 : index
    %c0_14 = arith.constant 0 : index
    %19 = vector.load %arg6[%c0_12, %c0_13, %c0_14] : memref<1x128x256xf32, #tpu.memory_space<vmem>>, vector<1x128x256xf32>
    %20 = vector.shape_cast %19 : vector<1x128x256xf32> to vector<128x256xf32>
    %21 = vector.shape_cast %18 : vector<128x256xf32> to vector<1x128x256xf32>
    tpu.vector_store %arg6[%c0_12, %c0_13, %c0_14], %21 {strides = array<i32>} : memref<1x128x256xf32, #tpu.memory_space<vmem>>, vector<1x128x256xf32>,
    return
  }
  func.func @transform_0(%arg0: i32, %arg1: i32) -> (i32, i32, i32) {
    %c0_i32 = arith.constant 0 : i32
    %c0_i32_0 = arith.constant 0 : i32
    return %arg0, %arg1, %c0_i32 : i32, i32, i32
  }
  func.func @transform_1(%arg0: i32, %arg1: i32) -> (i32, i32, i32) {
    %c0_i32 = arith.constant 0 : i32
    %c0_i32_0 = arith.constant 0 : i32
    return %arg0, %arg1, %c0_i32 : i32, i32, i32
  }
  func.func @transform_2(%arg0: i32, %arg1: i32) -> (i32, i32, i32) {
    %c0_i32 = arith.constant 0 : i32
    %c0_i32_0 = arith.constant 0 : i32
    %c0_i32_1 = arith.constant 0 : i32
    return %arg0, %c0_i32, %c0_i32_0 : i32, i32, i32
  }
  func.func @transform_3(%arg0: i32, %arg1: i32) -> (i32, i32, i32) {
    %c0_i32 = arith.constant 0 : i32
    %c0_i32_0 = arith.constant 0 : i32
    %c0_i32_1 = arith.constant 0 : i32
    return %arg0, %c0_i32, %c0_i32_0 : i32, i32, i32
  }
  func.func @transform_4(%arg0: i32, %arg1: i32) -> (i32, i32, i32) {
    %c0_i32 = arith.constant 0 : i32
    %c0_i32_0 = arith.constant 0 : i32
    return %arg0, %arg1, %c0_i32 : i32, i32, i32
  }
}

</mosaic_0001>

<llo_original>
// kernel: tpu_custom_call.1
$region0: #{tpu_custom_call.1}
  #allocation0 [shape = 'u32[]', space=smem, size = 0x4, offset = 0x4, fixed_abs, tag = 'smem constant byte address 0x4 - core index']
  #allocation1 [shape = 'u32[144,128]{1,0:T(1,128)}', space=vmem, size = 0x12000, scoped, tag = 'internal scratch']
  %s0 = inlined_call_operand.vmem [shape: f32[2,256,4], index: 0, kind: input, shape index: {}]
  %s1 = inlined_call_operand.vmem [shape: f32[2,256,1], index: 1, kind: input, shape index: {}]
  %s2 = inlined_call_operand.vmem [shape: f32[2,4,256], index: 2, kind: input, shape index: {}]
  %s3 = inlined_call_operand.vmem [shape: f32[2,1,256], index: 3, kind: input, shape index: {}]
  %s4 = inlined_call_operand.hbm [shape: f32[2,256,256], index: 4, kind: output, shape index: {}]
  %s5 = sld [smem:[#allocation0]]
  $region49: #{tpu_custom_call.1} parent=0
    _
  %s7 = ssub.s32 1, %s5
  %s8 = scalar_select 0, %s7, %s5
  $region1: #{tpu_custom_call.1} parent=0
    #allocation2 [shape = 'u8[262144]{0}', space=vmem, size = 0x40000, scoped, tag = 'output window, operand 0']
    #allocation3 [shape = 's32[2]{0}', space=sflag, size = 0x8, scoped, tag = 'scoped memory for tpu_custom_call.1']
    %9 = vsyncpa [#allocation3], 0
    %s10 = scalar_lea.sflag [#allocation3], 1
    %11 = vsyncpa %s10, 0
    loop: start=0, step=1, limit=6
    $region2: #{tpu_custom_call.1} parent=1 // loop_pre_header
      _
    $region3: #{tpu_custom_call.1} parent=1 // loop_header
      %s13 = sphi 0, %s17
      %p14 = scmp.ge.s32.totalorder %s13, 6
      %s20 = sphi 0, %s32
      %s21 = sphi 0, %s28
      %s22 = sphi 0, %s20
      %s23 = sphi 0, %s21
      %s24 = sphi 0, %s22
      %s25 = sphi 0, %s23
      %s37 = sphi 0, %s39
      %s40 = sphi 0, %s37
      %s41 = sphi 0, %s40
      %s57 = sphi 0, %s41
      %s65 = sphi 0, %s67
      %s68 = sphi 0, %s65
      %s69 = sphi 0, %s68
      %s85 = sphi 0, %s69
      %s91 = sphi 0, %s93
      %s94 = sphi 0, %s91
      %s95 = sphi 0, %s94
      %s111 = sphi 0, %s95
      %s117 = sphi 0, %s119
      %s120 = sphi 0, %s117
      %s121 = sphi 0, %s120
      %s137 = sphi 0, %s121
      %s145 = sphi 0, %s147
      %s148 = sphi 0, %s145
      %s149 = sphi 0, %s148
      %s165 = sphi 0, %s149
    $region4: #{tpu_custom_call.1} parent=1 // loop_header_branch
      %16 = sbr.rel (%p14) target = $region8
    $region5: #{tpu_custom_call.1} parent=1 // loop_body
      %s18 = ssub.s32 %s13, 1
      %s19 = ssub.s32 %s13, 2
      %s26 = sadd.s32 1, %s21
      %p27 = scmp.ge.s32.totalorder %s26, 2
      %s28 = scalar_select %p27, 0, %s26
      %s29 = sadd.s32 1, %s20
      %s30 = scalar_select %p27, %s29, %s20
      %p31 = scmp.ge.s32.totalorder %s30, 2
      %s32 = scalar_select %p31, 0, %s30
      %s33 = ssub.s32 %s20, %s32
      %s34 = ssub.s32 %s21, %s28
      %s35 = sor.u32 %s33, %s34
      %p36 = scmp.eq.s32.totalorder %s35, 0
      %s38 = sadd.s32 %s37, 1
      %s39 = scalar_select %p36, %s37, %s38
      %p42 = pneg %p36
      %p43 = scmp.eq.s32.totalorder %s13, 3
      %p44 = por %p42, %p43
      %p45 = scmp.ne.s32.totalorder %s37, %s40
      %p46 = scmp.eq.s32.totalorder %s13, 0
      %p47 = por %p45, %p46
      %p48 = scmp.ne.s32.totalorder %s37, %s40
      %p49 = scmp.eq.s32.totalorder %s18, 3
      %p50 = por %p48, %p49
      %p51 = scmp.ne.s32.totalorder %s40, %s41
      %p52 = scmp.eq.s32.totalorder %s18, 0
      %p53 = por %p51, %p52
      %p54 = scmp.ne.s32.totalorder %s40, %s41
      %p55 = scmp.eq.s32.totalorder %s19, 3
      %p56 = por %p54, %p55
      %p58 = scmp.ne.s32.totalorder %s41, %s57
      %p59 = scmp.eq.s32.totalorder %s19, 0
      %p60 = por %p58, %p59
      %s61 = ssub.s32 %s20, %s32
      %s62 = ssub.s32 %s21, %s28
      %s63 = sor.u32 %s61, %s62
      %p64 = scmp.eq.s32.totalorder %s63, 0
      %s66 = sadd.s32 %s65, 1
      %s67 = scalar_select %p64, %s65, %s66
      %p70 = pneg %p64
      %p71 = scmp.eq.s32.totalorder %s13, 3
      %p72 = por %p70, %p71
      %p73 = scmp.ne.s32.totalorder %s65, %s68
      %p74 = scmp.eq.s32.totalorder %s13, 0
      %p75 = por %p73, %p74
      %p76 = scmp.ne.s32.totalorder %s65, %s68
      %p77 = scmp.eq.s32.totalorder %s18, 3
      %p78 = por %p76, %p77
      %p79 = scmp.ne.s32.totalorder %s68, %s69
      %p80 = scmp.eq.s32.totalorder %s18, 0
      %p81 = por %p79, %p80
      %p82 = scmp.ne.s32.totalorder %s68, %s69
      %p83 = scmp.eq.s32.totalorder %s19, 3
      %p84 = por %p82, %p83
      %p86 = scmp.ne.s32.totalorder %s69, %s85
      %p87 = scmp.eq.s32.totalorder %s19, 0
      %p88 = por %p86, %p87
      %s89 = ssub.s32 %s20, %s32
      %p90 = scmp.eq.s32.totalorder %s89, 0
      %s92 = sadd.s32 %s91, 1
      %s93 = scalar_select %p90, %s91, %s92
      %p96 = pneg %p90
      %p97 = scmp.eq.s32.totalorder %s13, 3
      %p98 = por %p96, %p97
      %p99 = scmp.ne.s32.totalorder %s91, %s94
      %p100 = scmp.eq.s32.totalorder %s13, 0
      %p101 = por %p99, %p100
      %p102 = scmp.ne.s32.totalorder %s91, %s94
      %p103 = scmp.eq.s32.totalorder %s18, 3
      %p104 = por %p102, %p103
      %p105 = scmp.ne.s32.totalorder %s94, %s95
      %p106 = scmp.eq.s32.totalorder %s18, 0
      %p107 = por %p105, %p106
      %p108 = scmp.ne.s32.totalorder %s94, %s95
      %p109 = scmp.eq.s32.totalorder %s19, 3
      %p110 = por %p108, %p109
      %p112 = scmp.ne.s32.totalorder %s95, %s111
      %p113 = scmp.eq.s32.totalorder %s19, 0
      %p114 = por %p112, %p113
      %s115 = ssub.s32 %s20, %s32
      %p116 = scmp.eq.s32.totalorder %s115, 0
      %s118 = sadd.s32 %s117, 1
      %s119 = scalar_select %p116, %s117, %s118
      %p122 = pneg %p116
      %p123 = scmp.eq.s32.totalorder %s13, 3
      %p124 = por %p122, %p123
      %p125 = scmp.ne.s32.totalorder %s117, %s120
      %p126 = scmp.eq.s32.totalorder %s13, 0
      %p127 = por %p125, %p126
      %p128 = scmp.ne.s32.totalorder %s117, %s120
      %p129 = scmp.eq.s32.totalorder %s18, 3
      %p130 = por %p128, %p129
      %p131 = scmp.ne.s32.totalorder %s120, %s121
      %p132 = scmp.eq.s32.totalorder %s18, 0
      %p133 = por %p131, %p132
      %p134 = scmp.ne.s32.totalorder %s120, %s121
      %p135 = scmp.eq.s32.totalorder %s19, 3
      %p136 = por %p134, %p135
      %p138 = scmp.ne.s32.totalorder %s121, %s137
      %p139 = scmp.eq.s32.totalorder %s19, 0
      %p140 = por %p138, %p139
      %s141 = ssub.s32 %s20, %s32
      %s142 = ssub.s32 %s21, %s28
      %s143 = sor.u32 %s141, %s142
      %p144 = scmp.eq.s32.totalorder %s143, 0
      %s146 = sadd.s32 %s145, 1
      %s147 = scalar_select %p144, %s145, %s146
      %p150 = pneg %p144
      %p151 = scmp.eq.s32.totalorder %s13, 3
      %p152 = por %p150, %p151
      %p153 = scmp.ne.s32.totalorder %s145, %s148
      %p154 = scmp.eq.s32.totalorder %s13, 0
      %p155 = por %p153, %p154
      %p156 = scmp.ne.s32.totalorder %s145, %s148
      %p157 = scmp.eq.s32.totalorder %s18, 3
      %p158 = por %p156, %p157
      %p159 = scmp.ne.s32.totalorder %s148, %s149
      %p160 = scmp.eq.s32.totalorder %s18, 0
      %p161 = por %p159, %p160
      %p162 = scmp.ne.s32.totalorder %s148, %s149
      %p163 = scmp.eq.s32.totalorder %s19, 3
      %p164 = por %p162, %p163
      %p166 = scmp.ne.s32.totalorder %s149, %s165
      %p167 = scmp.eq.s32.totalorder %s19, 0
      %p168 = por %p166, %p167
      %p169 = scmp.le.s32.totalorder 1, %s13
      %p170 = scmp.lt.s32.totalorder %s13, 5
      %p171 = pnand %p169, %p170
      %p172 = pneg %p171
      // Predicated region
      $region9: #{tpu_custom_call.1} parent=5 // pred_check
        _
      $region10: #{tpu_custom_call.1} parent=5 // pred_check_branch
        %174 = sbr.rel (%p171) target = $region12
      $region11: #{tpu_custom_call.1} parent=5 // pred_region
        %s175 = ssub.s32 %s13, 1
      $region12: #{tpu_custom_call.1} parent=5 // pred_fallthru
        _
      %p176 = scmp.lt.s32.totalorder %s13, 4
      // Predicated region
      $region13: #{tpu_custom_call.1} parent=5 // pred_check
        %p177 = pneg %p176
      $region14: #{tpu_custom_call.1} parent=5 // pred_check_branch
        %179 = sbr.rel (%p177) target = $region16
      $region15: #{tpu_custom_call.1} parent=5 // pred_region
        // Predicated region
        $region17: #{tpu_custom_call.1} parent=15 // pred_check
          %p180 = pneg %p47
        $region18: #{tpu_custom_call.1} parent=15 // pred_check_branch
          %182 = sbr.rel (%p180) target = $region20
        $region19: #{tpu_custom_call.1} parent=15 // pred_region
          %s183 = smul.u32 16, %s21
          %p184 = scmp.lt.s32.totalorder %s20, 1
          %s185 = scalar_select %p184, %s20, 1
          %p186 = scmp.lt.s32.totalorder %s183, 31
          %s187 = scalar_select %p186, %s183, 31
          %s188 = smul.addr %s185, 32
          %s189 = sadd.s32 %s187, %s188
          %s190 = smul.addr %s189, 8
          %s191 = scalar_lea.vmem %s0, %s190
          %s192 = smul.u32 16, %s21
        $region20: #{tpu_custom_call.1} parent=15 // pred_fallthru
          _
        // Predicated region
        $region21: #{tpu_custom_call.1} parent=15 // pred_check
          %p193 = pneg %p75
        $region22: #{tpu_custom_call.1} parent=15 // pred_check_branch
          %195 = sbr.rel (%p193) target = $region24
        $region23: #{tpu_custom_call.1} parent=15 // pred_region
          %s196 = smul.u32 16, %s21
          %p197 = scmp.lt.s32.totalorder %s20, 1
          %s198 = scalar_select %p197, %s20, 1
          %p199 = scmp.lt.s32.totalorder %s196, 31
          %s200 = scalar_select %p199, %s196, 31
          %s201 = smul.addr %s198, 32
          %s202 = sadd.s32 %s200, %s201
          %s203 = smul.addr %s202, 8
          %s204 = scalar_lea.vmem %s1, %s203
          %s205 = smul.u32 16, %s21
        $region24: #{tpu_custom_call.1} parent=15 // pred_fallthru
          _
        // Predicated region
        $region25: #{tpu_custom_call.1} parent=15 // pred_check
          %p206 = pneg %p101
        $region26: #{tpu_custom_call.1} parent=15 // pred_check_branch
          %208 = sbr.rel (%p206) target = $region28
        $region27: #{tpu_custom_call.1} parent=15 // pred_region
          %p209 = scmp.lt.s32.totalorder %s20, 1
          %s210 = scalar_select %p209, %s20, 1
          %s211 = smul.addr %s210, 2
          %s212 = smul.addr %s211, 4
          %s213 = scalar_lea.vmem %s2, %s212
        $region28: #{tpu_custom_call.1} parent=15 // pred_fallthru
          _
        // Predicated region
        $region29: #{tpu_custom_call.1} parent=15 // pred_check
          %p214 = pneg %p127
        $region30: #{tpu_custom_call.1} parent=15 // pred_check_branch
          %216 = sbr.rel (%p214) target = $region32
        $region31: #{tpu_custom_call.1} parent=15 // pred_region
          %p217 = scmp.lt.s32.totalorder %s20, 1
          %s218 = scalar_select %p217, %s20, 1
          %s219 = smul.addr %s218, 2
          %s220 = scalar_lea.vmem %s3, %s219
        $region32: #{tpu_custom_call.1} parent=15 // pred_fallthru
          _
      $region16: #{tpu_custom_call.1} parent=5 // pred_fallthru
        _
      %p221 = scmp.le.s32.totalorder 1, %s13
      %p222 = scmp.lt.s32.totalorder %s13, 5
      %p223 = pnand %p221, %p222
      %p224 = pneg %p223
      // Predicated region
      $region33: #{tpu_custom_call.1} parent=5 // pred_check
        _
      $region34: #{tpu_custom_call.1} parent=5 // pred_check_branch
        %226 = sbr.rel (%p223) target = $region36
      $region35: #{tpu_custom_call.1} parent=5 // pred_region
        %s227 = ssub.s32 %s13, 1
        %s228 = smul.u32 16, %s23
        %p229 = scmp.lt.s32.totalorder %s22, 1
        %s230 = scalar_select %p229, %s22, 1
        %p231 = scmp.lt.s32.totalorder %s228, 31
        %s232 = scalar_select %p231, %s228, 31
        %s233 = smul.addr %s230, 32
        %s234 = sadd.s32 %s232, %s233
        %s235 = smul.addr %s234, 8
        %s236 = scalar_lea.vmem %s0, %s235
        %p237 = pneg %p53
        %p238 = pneg %p50
        %s239 = smul.u32 16, %s23
        %p240 = scmp.lt.s32.totalorder %s22, 1
        %s241 = scalar_select %p240, %s22, 1
        %p242 = scmp.lt.s32.totalorder %s239, 31
        %s243 = scalar_select %p242, %s239, 31
        %s244 = smul.addr %s241, 32
        %s245 = sadd.s32 %s243, %s244
        %s246 = smul.addr %s245, 8
        %s247 = scalar_lea.vmem %s1, %s246
        %p248 = pneg %p81
        %p249 = pneg %p78
        %p250 = scmp.lt.s32.totalorder %s22, 1
        %s251 = scalar_select %p250, %s22, 1
        %s252 = smul.addr %s251, 2
        %s253 = smul.addr %s252, 4
        %s254 = scalar_lea.vmem %s2, %s253
        %p255 = pneg %p107
        %p256 = pneg %p104
        %p257 = scmp.lt.s32.totalorder %s22, 1
        %s258 = scalar_select %p257, %s22, 1
        %s259 = smul.addr %s258, 2
        %s260 = scalar_lea.vmem %s3, %s259
        %p261 = pneg %p133
        %p262 = pneg %p130
        %p263 = pneg %p161
        %p264 = pneg %p158
        %s265 = sand.u32 %s148, 1
        %s266 = scalar_lea.sflag [#allocation3], %s265
        %s267 = sand.u32 %s148, 1
        %s268 = smul.addr %s267, 256
        %s269 = scalar_lea.vmem [#allocation2], %s268
        %s270 = smul.u32 16, %s23
        %p271 = scmp.lt.s32.totalorder %s22, 1
        %s272 = scalar_select %p271, %s22, 1
        %p273 = scmp.lt.s32.totalorder %s270, 31
        %s274 = scalar_select %p273, %s270, 31
        %s275 = smul.addr %s272, 32
        %s276 = sadd.s32 %s274, %s275
        %s277 = smul.addr %s276, 8
        %s278 = scalar_lea.vmem %s0, %s277
        %s279 = smul.u32 16, %s23
        %s280 = smul.u32 16, %s23
        %p281 = scmp.lt.s32.totalorder %s22, 1
        %s282 = scalar_select %p281, %s22, 1
        %p283 = scmp.lt.s32.totalorder %s280, 31
        %s284 = scalar_select %p283, %s280, 31
        %s285 = smul.addr %s282, 32
        %s286 = sadd.s32 %s284, %s285
        %s287 = smul.addr %s286, 8
        %s288 = scalar_lea.vmem %s1, %s287
        %s289 = smul.u32 16, %s23
        %p290 = scmp.lt.s32.totalorder %s22, 1
        %s291 = scalar_select %p290, %s22, 1
        %s292 = smul.addr %s291, 2
        %s293 = smul.addr %s292, 4
        %s294 = scalar_lea.vmem %s2, %s293
        %p295 = scmp.lt.s32.totalorder %s22, 1
        %s296 = scalar_select %p295, %s22, 1
        %s297 = smul.addr %s296, 2
        %s298 = scalar_lea.vmem %s3, %s297
        %s299 = smul.u32 16, %s23
        %v300 = vld [vmem:[%s278] sm:$0xff]
        %v301 = vld [vmem:[%s278 + $0x8] sm:$0xff]
        %v302 = vld [vmem:[%s278 + $0x10] sm:$0xff]
        %v303 = vld [vmem:[%s278 + $0x18] sm:$0xff]
        %v304 = vld [vmem:[%s278 + $0x20] sm:$0xff]
        %v305 = vld [vmem:[%s278 + $0x28] sm:$0xff]
        %v306 = vld [vmem:[%s278 + $0x30] sm:$0xff]
        %v307 = vld [vmem:[%s278 + $0x38] sm:$0xff]
        %v308 = vld [vmem:[%s278 + $0x40] sm:$0xff]
        %v309 = vld [vmem:[%s278 + $0x48] sm:$0xff]
        %v310 = vld [vmem:[%s278 + $0x50] sm:$0xff]
        %v311 = vld [vmem:[%s278 + $0x58] sm:$0xff]
        %v312 = vld [vmem:[%s278 + $0x60] sm:$0xff]
        %v313 = vld [vmem:[%s278 + $0x68] sm:$0xff]
        %v314 = vld [vmem:[%s278 + $0x70] sm:$0xff]
        %v315 = vld [vmem:[%s278 + $0x78] sm:$0xff]
        %v316 = vld [vmem:[%s288] sm:$0xff]
        %v317 = vld [vmem:[%s288 + $0x8] sm:$0xff]
        %v318 = vld [vmem:[%s288 + $0x10] sm:$0xff]
        %v319 = vld [vmem:[%s288 + $0x18] sm:$0xff]
        %v320 = vld [vmem:[%s288 + $0x20] sm:$0xff]
        %v321 = vld [vmem:[%s288 + $0x28] sm:$0xff]
        %v322 = vld [vmem:[%s288 + $0x30] sm:$0xff]
        %v323 = vld [vmem:[%s288 + $0x38] sm:$0xff]
        %v324 = vld [vmem:[%s288 + $0x40] sm:$0xff]
        %v325 = vld [vmem:[%s288 + $0x48] sm:$0xff]
        %v326 = vld [vmem:[%s288 + $0x50] sm:$0xff]
        %v327 = vld [vmem:[%s288 + $0x58] sm:$0xff]
        %v328 = vld [vmem:[%s288 + $0x60] sm:$0xff]
        %v329 = vld [vmem:[%s288 + $0x68] sm:$0xff]
        %v330 = vld [vmem:[%s288 + $0x70] sm:$0xff]
        %v331 = vld [vmem:[%s288 + $0x78] sm:$0xff]
        %v332 = vld [vmem:[%s294] sm:$0xff]
        %v333 = vld [vmem:[%s298] sm:$0x3]
        %v335 = vcombine.high %v332, %v332
        %vm336 = vcmask 31744
        %v338 = vsel %vm336, %v300, 0
        %v341 = vsel %vm336, %v301, 0
        %v344 = vsel %vm336, %v302, 0
        %v347 = vsel %vm336, %v303, 0
        %v350 = vsel %vm336, %v304, 0
        %v353 = vsel %vm336, %v305, 0
        %v356 = vsel %vm336, %v306, 0
        %v359 = vsel %vm336, %v307, 0
        %v362 = vsel %vm336, %v308, 0
        %v365 = vsel %vm336, %v309, 0
        %v368 = vsel %vm336, %v310, 0
        %v371 = vsel %vm336, %v311, 0
        %v374 = vsel %vm336, %v312, 0
        %v377 = vsel %vm336, %v313, 0
        %v380 = vsel %vm336, %v314, 0
        %v383 = vsel %vm336, %v315, 0
        %vm385 = vcmask 1043456
        %v386 = vsel %vm385, %v332, 0
        %v388 = vsel %vm385, %v335, 0
        %390 = vmatprep.subr.mxu0 0.0
        %391 = vmatpush1.msra.mxu0 0.0
        %392 = vmatprep.subr.mxu0 0.0
        %393 = vmatpush1.msra.mxu0 0.0
        %394 = vmatprep.subr.mxu0 0.0
        %395 = vmatpush1.msra.mxu0 0.0
        %396 = vmatprep.subr.mxu0 0.0
        %397 = vmatpush1.msra.mxu0 0.0
        %398 = vmatprep.subr.mxu0 0.0
        %399 = vmatpush1.msra.mxu0 0.0
        %400 = vmatprep.subr.mxu0 0.0
        %401 = vmatpush1.msra.mxu0 0.0
        %402 = vmatprep.subr.mxu0 0.0
        %403 = vmatpush1.msra.mxu0 0.0
        %404 = vmatprep.subr.mxu0 0.0
        %405 = vmatpush1.msra.mxu0 0.0
        %406 = vmatprep.subr.mxu0 0.0
        %407 = vmatpush1.msra.mxu0 0.0
        %408 = vmatprep.subr.mxu0 0.0
        %409 = vmatpush1.msra.mxu0 0.0
        %410 = vmatprep.subr.mxu0 0.0
        %411 = vmatpush1.msra.mxu0 0.0
        %412 = vmatprep.subr.mxu0 0.0
        %413 = vmatpush1.msra.mxu0 0.0
        %414 = vmatprep.subr.mxu0 0.0
        %415 = vmatpush1.msra.mxu0 0.0
        %416 = vmatprep.subr.mxu0 0.0
        %417 = vmatpush1.msra.mxu0 0.0
        %418 = vmatprep.subr.mxu0 0.0
        %419 = vmatpush1.msra.mxu0 0.0
        %420 = vmatprep.subr.mxu0 %v388
        %421 = vmatpush1.msra.mxu0 %v386
        %422 = vmatprep.subr.mxu0 0.0
        %423 = vmatpush2.msra.mxu0 0.0
        %424 = vmatprep.subr.mxu0 0.0
        %425 = vmatpush2.msra.mxu0 0.0
        %426 = vmatprep.subr.mxu0 0.0
        %427 = vmatpush2.msra.mxu0 0.0
        %428 = vmatprep.subr.mxu0 0.0
        %429 = vmatpush2.msra.mxu0 0.0
        %430 = vmatprep.subr.mxu0 0.0
        %431 = vmatpush2.msra.mxu0 0.0
        %432 = vmatprep.subr.mxu0 0.0
        %433 = vmatpush2.msra.mxu0 0.0
        %434 = vmatprep.subr.mxu0 0.0
        %435 = vmatpush2.msra.mxu0 0.0
        %436 = vmatprep.subr.mxu0 0.0
        %437 = vmatpush2.msra.mxu0 0.0
        %438 = vmatprep.subr.mxu0 0.0
        %439 = vmatpush2.msra.mxu0 0.0
        %440 = vmatprep.subr.mxu0 0.0
        %441 = vmatpush2.msra.mxu0 0.0
        %442 = vmatprep.subr.mxu0 0.0
        %443 = vmatpush2.msra.mxu0 0.0
        %444 = vmatprep.subr.mxu0 0.0
        %445 = vmatpush2.msra.mxu0 0.0
        %446 = vmatprep.subr.mxu0 0.0
        %447 = vmatpush2.msra.mxu0 0.0
        %448 = vmatprep.subr.mxu0 0.0
        %449 = vmatpush2.msra.mxu0 0.0
        %450 = vmatprep.subr.mxu0 0.0
        %451 = vmatpush2.msra.mxu0 0.0
        %452 = vmatprep.subr.mxu0 0.0
        %453 = vmatpush2.msra.mxu0 0.0
        %454 = vmatprep.mubr.f32.mxu0 0.0
        %455 = vmatmul.mubr.f32.gmra.mxu0 %v338
        %v456 = vpop.f32.mrf.mxu0
        %v457 = vadd.f32 0.0, %v456
        %v458 = vpop.f32.mrf.mxu0
        %v459 = vadd.f32 0.0, %v458
        %460 = vmatprep.mubr.f32.mxu0 0.0
        %461 = vmatmul.mubr.f32.gmra.mxu0 %v341
        %v462 = vpop.f32.mrf.mxu0
        %v463 = vadd.f32 0.0, %v462
        %v464 = vpop.f32.mrf.mxu0
        %v465 = vadd.f32 0.0, %v464
        %466 = vmatprep.mubr.f32.mxu0 0.0
        %467 = vmatmul.mubr.f32.gmra.mxu0 %v344
        %v468 = vpop.f32.mrf.mxu0
        %v469 = vadd.f32 0.0, %v468
        %v470 = vpop.f32.mrf.mxu0
        %v471 = vadd.f32 0.0, %v470
        %472 = vmatprep.mubr.f32.mxu0 0.0
        %473 = vmatmul.mubr.f32.gmra.mxu0 %v347
        %v474 = vpop.f32.mrf.mxu0
        %v475 = vadd.f32 0.0, %v474
        %v476 = vpop.f32.mrf.mxu0
        %v477 = vadd.f32 0.0, %v476
        %478 = vmatprep.mubr.f32.mxu0 0.0
        %479 = vmatmul.mubr.f32.gmra.mxu0 %v350
        %v480 = vpop.f32.mrf.mxu0
        %v481 = vadd.f32 0.0, %v480
        %v482 = vpop.f32.mrf.mxu0
        %v483 = vadd.f32 0.0, %v482
        %484 = vmatprep.mubr.f32.mxu0 0.0
        %485 = vmatmul.mubr.f32.gmra.mxu0 %v353
        %v486 = vpop.f32.mrf.mxu0
        %v487 = vadd.f32 0.0, %v486
        %v488 = vpop.f32.mrf.mxu0
        %v489 = vadd.f32 0.0, %v488
        %490 = vmatprep.mubr.f32.mxu0 0.0
        %491 = vmatmul.mubr.f32.gmra.mxu0 %v356
        %v492 = vpop.f32.mrf.mxu0
        %v493 = vadd.f32 0.0, %v492
        %v494 = vpop.f32.mrf.mxu0
        %v495 = vadd.f32 0.0, %v494
        %496 = vmatprep.mubr.f32.mxu0 0.0
        %497 = vmatmul.mubr.f32.gmra.mxu0 %v359
        %v498 = vpop.f32.mrf.mxu0
        %v499 = vadd.f32 0.0, %v498
        %v500 = vpop.f32.mrf.mxu0
        %v501 = vadd.f32 0.0, %v500
        %502 = vmatprep.mubr.f32.mxu0 0.0
        %503 = vmatmul.mubr.f32.gmra.mxu0 %v362
        %v504 = vpop.f32.mrf.mxu0
        %v505 = vadd.f32 0.0, %v504
        %v506 = vpop.f32.mrf.mxu0
        %v507 = vadd.f32 0.0, %v506
        %508 = vmatprep.mubr.f32.mxu0 0.0
        %509 = vmatmul.mubr.f32.gmra.mxu0 %v365
        %v510 = vpop.f32.mrf.mxu0
        %v511 = vadd.f32 0.0, %v510
        %v512 = vpop.f32.mrf.mxu0
        %v513 = vadd.f32 0.0, %v512
        %514 = vmatprep.mubr.f32.mxu0 0.0
        %515 = vmatmul.mubr.f32.gmra.mxu0 %v368
        %v516 = vpop.f32.mrf.mxu0
        %v517 = vadd.f32 0.0, %v516
        %v518 = vpop.f32.mrf.mxu0
        %v519 = vadd.f32 0.0, %v518
        %520 = vmatprep.mubr.f32.mxu0 0.0
        %521 = vmatmul.mubr.f32.gmra.mxu0 %v371
        %v522 = vpop.f32.mrf.mxu0
        %v523 = vadd.f32 0.0, %v522
        %v524 = vpop.f32.mrf.mxu0
        %v525 = vadd.f32 0.0, %v524
        %526 = vmatprep.mubr.f32.mxu0 0.0
        %527 = vmatmul.mubr.f32.gmra.mxu0 %v374
        %v528 = vpop.f32.mrf.mxu0
        %v529 = vadd.f32 0.0, %v528
        %v530 = vpop.f32.mrf.mxu0
        %v531 = vadd.f32 0.0, %v530
        %532 = vmatprep.mubr.f32.mxu0 0.0
        %533 = vmatmul.mubr.f32.gmra.mxu0 %v377
        %v534 = vpop.f32.mrf.mxu0
        %v535 = vadd.f32 0.0, %v534
        %v536 = vpop.f32.mrf.mxu0
        %v537 = vadd.f32 0.0, %v536
        %538 = vmatprep.mubr.f32.mxu0 0.0
        %539 = vmatmul.mubr.f32.gmra.mxu0 %v380
        %v540 = vpop.f32.mrf.mxu0
        %v541 = vadd.f32 0.0, %v540
        %v542 = vpop.f32.mrf.mxu0
        %v543 = vadd.f32 0.0, %v542
        %544 = vmatprep.mubr.f32.mxu0 0.0
        %545 = vmatmul.mubr.f32.gmra.mxu0 %v383
        %v546 = vpop.f32.mrf.mxu0
        %v547 = vadd.f32 0.0, %v546
        %v548 = vpop.f32.mrf.mxu0
        %v549 = vadd.f32 0.0, %v548
        %550 = vdwg.mxu0
        %v552 = vlaneseq
        %v553 = vshrl.u32 %v552, 7
        %v554 = vsub.s32 0, %v553
        %v555 = vrot.slane %v333, %v554
        %v556 = vlaneseq
        %v557 = vshrl.u32 %v556, 7
        %v558 = vsub.s32 1, %v557
        %v559 = vrot.slane %v333, %v558
        %v562 = vsub.f32 %v457, %v555
        %v563 = vsub.f32 %v459, %v559
        %v564 = vsub.f32 %v463, %v555
        %v565 = vsub.f32 %v465, %v559
        %v566 = vsub.f32 %v469, %v555
        %v567 = vsub.f32 %v471, %v559
        %v568 = vsub.f32 %v475, %v555
        %v569 = vsub.f32 %v477, %v559
        %v570 = vsub.f32 %v481, %v555
        %v571 = vsub.f32 %v483, %v559
        %v572 = vsub.f32 %v487, %v555
        %v573 = vsub.f32 %v489, %v559
        %v574 = vsub.f32 %v493, %v555
        %v575 = vsub.f32 %v495, %v559
        %v576 = vsub.f32 %v499, %v555
        %v577 = vsub.f32 %v501, %v559
        %v578 = vsub.f32 %v505, %v555
        %v579 = vsub.f32 %v507, %v559
        %v580 = vsub.f32 %v511, %v555
        %v581 = vsub.f32 %v513, %v559
        %v582 = vsub.f32 %v517, %v555
        %v583 = vsub.f32 %v519, %v559
        %v584 = vsub.f32 %v523, %v555
        %v585 = vsub.f32 %v525, %v559
        %v586 = vsub.f32 %v529, %v555
        %v587 = vsub.f32 %v531, %v559
        %v588 = vsub.f32 %v535, %v555
        %v589 = vsub.f32 %v537, %v559
        %v590 = vsub.f32 %v541, %v555
        %v591 = vsub.f32 %v543, %v559
        %v592 = vsub.f32 %v547, %v555
        %v593 = vsub.f32 %v549, %v559
        %595 = vset.pattern.permute.xlu0 0
        %596 = vperm.xlu0 %595, %v316
        %v597 = vpop.permute.xlu0 %596
        %600 = vset.pattern.permute.xlu0 0
        %601 = vperm.xlu0 %600, %v317
        %v602 = vpop.permute.xlu0 %601
        %605 = vset.pattern.permute.xlu0 0
        %606 = vperm.xlu0 %605, %v318
        %v607 = vpop.permute.xlu0 %606
        %610 = vset.pattern.permute.xlu0 0
        %611 = vperm.xlu0 %610, %v319
        %v612 = vpop.permute.xlu0 %611
        %615 = vset.pattern.permute.xlu0 0
        %616 = vperm.xlu0 %615, %v320
        %v617 = vpop.permute.xlu0 %616
        %620 = vset.pattern.permute.xlu0 0
        %621 = vperm.xlu0 %620, %v321
        %v622 = vpop.permute.xlu0 %621
        %625 = vset.pattern.permute.xlu0 0
        %626 = vperm.xlu0 %625, %v322
        %v627 = vpop.permute.xlu0 %626
        %630 = vset.pattern.permute.xlu0 0
        %631 = vperm.xlu0 %630, %v323
        %v632 = vpop.permute.xlu0 %631
        %635 = vset.pattern.permute.xlu0 0
        %636 = vperm.xlu0 %635, %v324
        %v637 = vpop.permute.xlu0 %636
        %640 = vset.pattern.permute.xlu0 0
        %641 = vperm.xlu0 %640, %v325
        %v642 = vpop.permute.xlu0 %641
        %645 = vset.pattern.permute.xlu0 0
        %646 = vperm.xlu0 %645, %v326
        %v647 = vpop.permute.xlu0 %646
        %650 = vset.pattern.permute.xlu0 0
        %651 = vperm.xlu0 %650, %v327
        %v652 = vpop.permute.xlu0 %651
        %655 = vset.pattern.permute.xlu0 0
        %656 = vperm.xlu0 %655, %v328
        %v657 = vpop.permute.xlu0 %656
        %660 = vset.pattern.permute.xlu0 0
        %661 = vperm.xlu0 %660, %v329
        %v662 = vpop.permute.xlu0 %661
        %665 = vset.pattern.permute.xlu0 0
        %666 = vperm.xlu0 %665, %v330
        %v667 = vpop.permute.xlu0 %666
        %670 = vset.pattern.permute.xlu0 0
        %671 = vperm.xlu0 %670, %v331
        %v672 = vpop.permute.xlu0 %671
        %v674 = vsub.f32 %v562, %v597
        %v675 = vsub.f32 %v563, %v597
        %v676 = vsub.f32 %v564, %v602
        %v677 = vsub.f32 %v565, %v602
        %v678 = vsub.f32 %v566, %v607
        %v679 = vsub.f32 %v567, %v607
        %v680 = vsub.f32 %v568, %v612
        %v681 = vsub.f32 %v569, %v612
        %v682 = vsub.f32 %v570, %v617
        %v683 = vsub.f32 %v571, %v617
        %v684 = vsub.f32 %v572, %v622
        %v685 = vsub.f32 %v573, %v622
        %v686 = vsub.f32 %v574, %v627
        %v687 = vsub.f32 %v575, %v627
        %v688 = vsub.f32 %v576, %v632
        %v689 = vsub.f32 %v577, %v632
        %v690 = vsub.f32 %v578, %v637
        %v691 = vsub.f32 %v579, %v637
        %v692 = vsub.f32 %v580, %v642
        %v693 = vsub.f32 %v581, %v642
        %v694 = vsub.f32 %v582, %v647
        %v695 = vsub.f32 %v583, %v647
        %v696 = vsub.f32 %v584, %v652
        %v697 = vsub.f32 %v585, %v652
        %v698 = vsub.f32 %v586, %v657
        %v699 = vsub.f32 %v587, %v657
        %v700 = vsub.f32 %v588, %v662
        %v701 = vsub.f32 %v589, %v662
        %v702 = vsub.f32 %v590, %v667
        %v703 = vsub.f32 %v591, %v667
        %v704 = vsub.f32 %v592, %v672
        %v705 = vsub.f32 %v593, %v672
        %v706 = vmul.f32 %v674, 1.442695
        %v707 = vpow.pop %v706
        %v708 = vmul.f32 %v675, 1.442695
        %v709 = vpow.pop %v708
        %v710 = vmul.f32 %v676, 1.442695
        %v711 = vpow.pop %v710
        %v712 = vmul.f32 %v677, 1.442695
        %v713 = vpow.pop %v712
        %v714 = vmul.f32 %v678, 1.442695
        %v715 = vpow.pop %v714
        %v716 = vmul.f32 %v679, 1.442695
        %v717 = vpow.pop %v716
        %v718 = vmul.f32 %v680, 1.442695
        %v719 = vpow.pop %v718
        %v720 = vmul.f32 %v681, 1.442695
        %v721 = vpow.pop %v720
        %v722 = vmul.f32 %v682, 1.442695
        %v723 = vpow.pop %v722
        %v724 = vmul.f32 %v683, 1.442695
        %v725 = vpow.pop %v724
        %v726 = vmul.f32 %v684, 1.442695
        %v727 = vpow.pop %v726
        %v728 = vmul.f32 %v685, 1.442695
        %v729 = vpow.pop %v728
        %v730 = vmul.f32 %v686, 1.442695
        %v731 = vpow.pop %v730
        %v732 = vmul.f32 %v687, 1.442695
        %v733 = vpow.pop %v732
        %v734 = vmul.f32 %v688, 1.442695
        %v735 = vpow.pop %v734
        %v736 = vmul.f32 %v689, 1.442695
        %v737 = vpow.pop %v736
        %v738 = vmul.f32 %v690, 1.442695
        %v739 = vpow.pop %v738
        %v740 = vmul.f32 %v691, 1.442695
        %v741 = vpow.pop %v740
        %v742 = vmul.f32 %v692, 1.442695
        %v743 = vpow.pop %v742
        %v744 = vmul.f32 %v693, 1.442695
        %v745 = vpow.pop %v744
        %v746 = vmul.f32 %v694, 1.442695
        %v747 = vpow.pop %v746
        %v748 = vmul.f32 %v695, 1.442695
        %v749 = vpow.pop %v748
        %v750 = vmul.f32 %v696, 1.442695
        %v751 = vpow.pop %v750
        %v752 = vmul.f32 %v697, 1.442695
        %v753 = vpow.pop %v752
        %v754 = vmul.f32 %v698, 1.442695
        %v755 = vpow.pop %v754
        %v756 = vmul.f32 %v699, 1.442695
        %v757 = vpow.pop %v756
        %v758 = vmul.f32 %v700, 1.442695
        %v759 = vpow.pop %v758
        %v760 = vmul.f32 %v701, 1.442695
        %v761 = vpow.pop %v760
        %v762 = vmul.f32 %v702, 1.442695
        %v763 = vpow.pop %v762
        %v764 = vmul.f32 %v703, 1.442695
        %v765 = vpow.pop %v764
        %v766 = vmul.f32 %v704, 1.442695
        %v767 = vpow.pop %v766
        %v768 = vmul.f32 %v705, 1.442695
        %v769 = vpow.pop %v768
        %v770 = vadd.f32 %v707, %v709
        %771 = vadd.xlane.f32.xlu0 %v770
        %v772 = vpop.xlane.xlu0 %771
        %v773 = vadd.f32 %v711, %v713
        %774 = vadd.xlane.f32.xlu0 %v773
        %v775 = vpop.xlane.xlu0 %774
        %v776 = vadd.f32 %v715, %v717
        %777 = vadd.xlane.f32.xlu0 %v776
        %v778 = vpop.xlane.xlu0 %777
        %v779 = vadd.f32 %v719, %v721
        %780 = vadd.xlane.f32.xlu0 %v779
        %v781 = vpop.xlane.xlu0 %780
        %v782 = vadd.f32 %v723, %v725
        %783 = vadd.xlane.f32.xlu0 %v782
        %v784 = vpop.xlane.xlu0 %783
        %v785 = vadd.f32 %v727, %v729
        %786 = vadd.xlane.f32.xlu0 %v785
        %v787 = vpop.xlane.xlu0 %786
        %v788 = vadd.f32 %v731, %v733
        %789 = vadd.xlane.f32.xlu0 %v788
        %v790 = vpop.xlane.xlu0 %789
        %v791 = vadd.f32 %v735, %v737
        %792 = vadd.xlane.f32.xlu0 %v791
        %v793 = vpop.xlane.xlu0 %792
        %v794 = vadd.f32 %v739, %v741
        %795 = vadd.xlane.f32.xlu0 %v794
        %v796 = vpop.xlane.xlu0 %795
        %v797 = vadd.f32 %v743, %v745
        %798 = vadd.xlane.f32.xlu0 %v797
        %v799 = vpop.xlane.xlu0 %798
        %v800 = vadd.f32 %v747, %v749
        %801 = vadd.xlane.f32.xlu0 %v800
        %v802 = vpop.xlane.xlu0 %801
        %v803 = vadd.f32 %v751, %v753
        %804 = vadd.xlane.f32.xlu0 %v803
        %v805 = vpop.xlane.xlu0 %804
        %v806 = vadd.f32 %v755, %v757
        %807 = vadd.xlane.f32.xlu0 %v806
        %v808 = vpop.xlane.xlu0 %807
        %v809 = vadd.f32 %v759, %v761
        %810 = vadd.xlane.f32.xlu0 %v809
        %v811 = vpop.xlane.xlu0 %810
        %v812 = vadd.f32 %v763, %v765
        %813 = vadd.xlane.f32.xlu0 %v812
        %v814 = vpop.xlane.xlu0 %813
        %v815 = vadd.f32 %v767, %v769
        %816 = vadd.xlane.f32.xlu0 %v815
        %v817 = vpop.xlane.xlu0 %816
        %v818 = vrcp.pop %v772
        %v819 = vrcp.pop %v775
        %v820 = vrcp.pop %v778
        %v821 = vrcp.pop %v781
        %v822 = vrcp.pop %v784
        %v823 = vrcp.pop %v787
        %v824 = vrcp.pop %v790
        %v825 = vrcp.pop %v793
        %v826 = vrcp.pop %v796
        %v827 = vrcp.pop %v799
        %v828 = vrcp.pop %v802
        %v829 = vrcp.pop %v805
        %v830 = vrcp.pop %v808
        %v831 = vrcp.pop %v811
        %v832 = vrcp.pop %v814
        %v833 = vrcp.pop %v817
        %v834 = vmul.f32 %v707, %v818
        %v835 = vmul.f32 %v709, %v818
        %v836 = vmul.f32 %v711, %v819
        %v837 = vmul.f32 %v713, %v819
        %v838 = vmul.f32 %v715, %v820
        %v839 = vmul.f32 %v717, %v820
        %v840 = vmul.f32 %v719, %v821
        %v841 = vmul.f32 %v721, %v821
        %v842 = vmul.f32 %v723, %v822
        %v843 = vmul.f32 %v725, %v822
        %v844 = vmul.f32 %v727, %v823
        %v845 = vmul.f32 %v729, %v823
        %v846 = vmul.f32 %v731, %v824
        %v847 = vmul.f32 %v733, %v824
        %v848 = vmul.f32 %v735, %v825
        %v849 = vmul.f32 %v737, %v825
        %v850 = vmul.f32 %v739, %v826
        %v851 = vmul.f32 %v741, %v826
        %v852 = vmul.f32 %v743, %v827
        %v853 = vmul.f32 %v745, %v827
        %v854 = vmul.f32 %v747, %v828
        %v855 = vmul.f32 %v749, %v828
        %v856 = vmul.f32 %v751, %v829
        %v857 = vmul.f32 %v753, %v829
        %v858 = vmul.f32 %v755, %v830
        %v859 = vmul.f32 %v757, %v830
        %v860 = vmul.f32 %v759, %v831
        %v861 = vmul.f32 %v761, %v831
        %v862 = vmul.f32 %v763, %v832
        %v863 = vmul.f32 %v765, %v832
        %v864 = vmul.f32 %v767, %v833
        %v865 = vmul.f32 %v769, %v833
        %866 = vst [vmem:[%s269] sm:$0xff] %v834
        %867 = vst [vmem:[%s269 + $0x8] sm:$0xff] %v835
        %868 = vst [vmem:[%s269 + $0x10] sm:$0xff] %v836
        %869 = vst [vmem:[%s269 + $0x18] sm:$0xff] %v837
        %870 = vst [vmem:[%s269 + $0x20] sm:$0xff] %v838
        %871 = vst [vmem:[%s269 + $0x28] sm:$0xff] %v839
        %872 = vst [vmem:[%s269 + $0x30] sm:$0xff] %v840
        %873 = vst [vmem:[%s269 + $0x38] sm:$0xff] %v841
        %874 = vst [vmem:[%s269 + $0x40] sm:$0xff] %v842
        %875 = vst [vmem:[%s269 + $0x48] sm:$0xff] %v843
        %876 = vst [vmem:[%s269 + $0x50] sm:$0xff] %v844
        %877 = vst [vmem:[%s269 + $0x58] sm:$0xff] %v845
        %878 = vst [vmem:[%s269 + $0x60] sm:$0xff] %v846
        %879 = vst [vmem:[%s269 + $0x68] sm:$0xff] %v847
        %880 = vst [vmem:[%s269 + $0x70] sm:$0xff] %v848
        %881 = vst [vmem:[%s269 + $0x78] sm:$0xff] %v849
        %882 = vst [vmem:[%s269 + $0x80] sm:$0xff] %v850
        %883 = vst [vmem:[%s269 + $0x88] sm:$0xff] %v851
        %884 = vst [vmem:[%s269 + $0x90] sm:$0xff] %v852
        %885 = vst [vmem:[%s269 + $0x98] sm:$0xff] %v853
        %886 = vst [vmem:[%s269 + $0xa0] sm:$0xff] %v854
        %887 = vst [vmem:[%s269 + $0xa8] sm:$0xff] %v855
        %888 = vst [vmem:[%s269 + $0xb0] sm:$0xff] %v856
        %889 = vst [vmem:[%s269 + $0xb8] sm:$0xff] %v857
        %890 = vst [vmem:[%s269 + $0xc0] sm:$0xff] %v858
        %891 = vst [vmem:[%s269 + $0xc8] sm:$0xff] %v859
        %892 = vst [vmem:[%s269 + $0xd0] sm:$0xff] %v860
        %893 = vst [vmem:[%s269 + $0xd8] sm:$0xff] %v861
        %894 = vst [vmem:[%s269 + $0xe0] sm:$0xff] %v862
        %895 = vst [vmem:[%s269 + $0xe8] sm:$0xff] %v863
        %896 = vst [vmem:[%s269 + $0xf0] sm:$0xff] %v864
        %897 = vst [vmem:[%s269 + $0xf8] sm:$0xff] %v865
        %s898 = sand.u32 %s148, 1
        %s899 = scalar_lea.sflag [#allocation3], %s898
        %s900 = sand.u32 %s148, 1
        %s901 = smul.addr %s900, 256
        %s902 = scalar_lea.vmem [#allocation2], %s901
        // Predicated region
        $region37: #{tpu_custom_call.1} parent=35 // pred_check
          %p903 = pneg %p158
        $region38: #{tpu_custom_call.1} parent=35 // pred_check_branch
          %905 = sbr.rel (%p903) target = $region40
        $region39: #{tpu_custom_call.1} parent=35 // pred_region
          %s906 = smul.u32 16, %s23
          %s908 = ssub.s32 4096, 4096
          %909 = vsyncadd %s899, %s908
          %s910 = smul.addr %s906, 2
          %s911 = smul.addr %s22, 64
          %s912 = sadd.s32 %s910, %s911
          %s913 = smul.addr %s912, 128
          %s914 = scalar_lea.hbm %s4, %s913
          %s915 = sshll.u32 %s902, 4
          %s916 = int_to_ptr.vmem [resolvable:$true] %s915
          %921 = dma.vmem_to_hbm [thread:$0]  %s916, 4096, %s914, %s899, 256, 256, 16
        $region40: #{tpu_custom_call.1} parent=35 // pred_fallthru
          _
      $region36: #{tpu_custom_call.1} parent=5 // pred_fallthru
        _
      %p922 = scmp.le.s32.totalorder 2, %s13
      // Predicated region
      $region41: #{tpu_custom_call.1} parent=5 // pred_check
        %p923 = pneg %p922
      $region42: #{tpu_custom_call.1} parent=5 // pred_check_branch
        %925 = sbr.rel (%p923) target = $region44
      $region43: #{tpu_custom_call.1} parent=5 // pred_region
        %s926 = ssub.s32 %s13, 2
        // Predicated region
        $region45: #{tpu_custom_call.1} parent=43 // pred_check
          %p927 = pneg %p164
        $region46: #{tpu_custom_call.1} parent=43 // pred_check_branch
          %929 = sbr.rel (%p927) target = $region48
        $region47: #{tpu_custom_call.1} parent=43 // pred_region
          %s930 = sand.u32 %s149, 1
          %s931 = scalar_lea.sflag [#allocation3], %s930
          %s932 = sand.u32 %s149, 1
          %s933 = smul.addr %s932, 256
          %s934 = scalar_lea.vmem [#allocation2], %s933
          %935 = dma.done %s931, 4096
        $region48: #{tpu_custom_call.1} parent=43 // pred_fallthru
          _
      $region44: #{tpu_custom_call.1} parent=5 // pred_fallthru
        _
    $region6: #{tpu_custom_call.1} parent=1 // loop_footer
      %s17 = sadd.s32 1, %s13
    $region7: #{tpu_custom_call.1} parent=1 // loop_footer_branch
      %12 = sbr.rel target = $region3
    $region8: #{tpu_custom_call.1} parent=1 // loop_exit
      _
    %936 = vsyncpa [#allocation3], 1
    %s937 = scalar_lea.sflag [#allocation3], 1
    %938 = vsyncpa %s937, 1

</llo_original>
